<compile_context>
chip_gen: v5e
topology: v5e:2x2
jax: 0.10.0
libtpu: 0.0.40
codegen_flags: <defaults>
</compile_context>

<pallas_src>
import jax
import jax.numpy as jnp
from jax.experimental import pallas as pl
from jax.experimental.pallas import tpu as pltpu


_NEG_BIG = -1e30  # pad value for unused class lanes -> exp() underflows to 0


def _round_up(x, m):
    return (x + m - 1) // m * m


def _choose_tile_n(n):
    # Prefer large MXU-aligned row tiles; keep grid >= 2 where possible (v7x has
    # 2 TensorCores that shard the "parallel" row axis).
    for t in (512, 256, 128):
        if n >= 2 * t:
            return t
    return max(8, min(128, _round_up(n, 8)))


def m3s_kernel(x_ref, w1_ref, b1_ref, w2_ref, b2_ref, logits_ref, preds_ref):
    # encoder: Linear + ReLU  (MXU matmul, f32 accumulation)
    h = jnp.dot(x_ref[...], w1_ref[...], preferred_element_type=jnp.float32)
    h = jnp.maximum(h + b1_ref[...], 0.0)
    # classifier: Linear -> logits (class axis is lane-dense / padded to 128k)
    logits = jnp.dot(h.astype(w2_ref.dtype), w2_ref[...],
                     preferred_element_type=jnp.float32) + b2_ref[...]
    logits_ref[...] = logits.astype(logits_ref.dtype)
    # predictions = softmax(logits, dim=-1); padded lanes hold -1e30 -> weight 0
    m = jnp.max(logits, axis=-1, keepdims=True)
    e = jnp.exp(logits - m)
    inv = pl.reciprocal(jnp.sum(e, axis=-1, keepdims=True), approx=True)
    preds_ref[...] = (e * inv).astype(preds_ref.dtype)


def m3s_forward(x, w1, b1, w2, b2, *, tile_n=None, use_bf16=True):
    N, in_dim = x.shape
    hidden = w1.shape[1]
    n_classes = w2.shape[1]

    if tile_n is None:
        tile_n = _choose_tile_n(N)

    c_pad = _round_up(n_classes, 128)   # lane-dense output width
    n_pad = _round_up(N, tile_n)        # row padding for arbitrary N

    cdtype = jnp.bfloat16 if use_bf16 else jnp.float32

    xk = x.astype(cdtype)
    if n_pad != N:
        xk = jnp.pad(xk, ((0, n_pad - N), (0, 0)))

    w1k = w1.astype(cdtype)
    b1k = b1.astype(jnp.float32)
    w2k = w2.astype(cdtype)
    b2k = b2.astype(jnp.float32)
    if c_pad != n_classes:
        w2k = jnp.pad(w2k, ((0, 0), (0, c_pad - n_classes)))
        b2k = jnp.pad(b2k, ((0, 0), (0, c_pad - n_classes)),
                      constant_values=_NEG_BIG)

    grid = (n_pad // tile_n,)

    # VMEM budget: double-buffered x tile + resident (double-buffered) weights
    # + double-buffered f32 outputs.  Cap at 64 MiB so v7x stays happy.
    wbytes = jnp.dtype(cdtype).itemsize
    est = (2 * tile_n * in_dim * wbytes
           + 2 * (in_dim * hidden + hidden * c_pad) * wbytes
           + 2 * (hidden + c_pad) * 4
           + 2 * 2 * tile_n * c_pad * 4)
    vmem_limit = int(min(max(2 * est, 32 << 20), 64 << 20))

    logits_p, preds_p = pl.pallas_call(
        m3s_kernel,
        out_shape=(
            jax.ShapeDtypeStruct((n_pad, c_pad), jnp.float32),   # logits (padded)
            jax.ShapeDtypeStruct((n_pad, c_pad), jnp.float32),   # softmax (padded)
        ),
        grid_spec=pltpu.PrefetchScalarGridSpec(
            num_scalar_prefetch=0,
            grid=grid,
            in_specs=[
                pl.BlockSpec((tile_n, in_dim), lambda i: (i, 0)),     # x row tile
                pl.BlockSpec((in_dim, hidden), lambda i: (0, 0)),     # W1 (resident)
                pl.BlockSpec((1, hidden), lambda i: (0, 0)),          # b1
                pl.BlockSpec((hidden, c_pad), lambda i: (0, 0)),      # W2 (resident)
                pl.BlockSpec((1, c_pad), lambda i: (0, 0)),           # b2
            ],
            out_specs=[
                pl.BlockSpec((tile_n, c_pad), lambda i: (i, 0)),
                pl.BlockSpec((tile_n, c_pad), lambda i: (i, 0)),
            ],
        ),
        compiler_params=pltpu.CompilerParams(
            dimension_semantics=("parallel",),
            vmem_limit_bytes=vmem_limit),
    )(xk, w1k, b1k, w2k, b2k)

    return logits_p[:N, :n_classes], preds_p[:N, :n_classes]


def m3s_reference(x, w1, b1, w2, b2, *, use_bf16=True):
    # Plain-JAX reference with the same bf16 cast policy as the kernel.
    cdtype = jnp.bfloat16 if use_bf16 else jnp.float32
    h = jnp.dot(x.astype(cdtype), w1.astype(cdtype),
                preferred_element_type=jnp.float32) + b1
    h = jnp.maximum(h, 0.0)
    logits = jnp.dot(h.astype(cdtype), w2.astype(cdtype),
                     preferred_element_type=jnp.float32) + b2
    preds = jax.nn.softmax(logits, axis=-1)
    return logits, preds


def init_params(key, in_dim, hidden, n_classes):
    # Deterministic synthetic init (mimics nn.Linear's uniform(-1/sqrt(fan_in), .)).
    k1, k2, k3, k4 = jax.random.split(key, 4)
    lim1 = 1.0 / jnp.sqrt(in_dim)
    lim2 = 1.0 / jnp.sqrt(hidden)
    w1 = jax.random.uniform(k1, (in_dim, hidden), jnp.float32, -lim1, lim1)
    b1 = jax.random.uniform(k2, (1, hidden), jnp.float32, -lim1, lim1)
    w2 = jax.random.uniform(k3, (hidden, n_classes), jnp.float32, -lim2, lim2)
    b2 = jax.random.uniform(k4, (1, n_classes), jnp.float32, -lim2, lim2)
    return w1, b1, w2, b2


def _check(key, N, in_dim, hidden, n_classes, use_bf16=True):
    kx, kp = jax.random.split(key)
    x = jax.random.normal(kx, (N, in_dim), jnp.float32)
    w1, b1, w2, b2 = init_params(kp, in_dim, hidden, n_classes)

    logits, preds = m3s_forward(x, w1, b1, w2, b2, use_bf16=use_bf16)
    jax.block_until_ready((logits, preds))

    logits_ref, preds_ref = m3s_reference(x, w1, b1, w2, b2, use_bf16=use_bf16)
    assert logits.shape == (N, n_classes) and preds.shape == (N, n_classes)
    assert jnp.allclose(logits, logits_ref, atol=5e-3, rtol=5e-3), "logits mismatch"
    assert jnp.allclose(preds, preds_ref, atol=5e-3, rtol=5e-3), "preds mismatch"


if __name__ == "__main__":
    key = jax.random.PRNGKey(0)
    k_small, k_big = jax.random.split(key)

    # Small shapes consistent with the module's forward (samples x features).
    _check(k_small, N=16, in_dim=32, hidden=32, n_classes=8)
    # Multi-tile case: exercises row tiling, tail padding and class-lane padding.
    _check(k_big, N=384, in_dim=128, hidden=256, n_classes=10)

    print("KERNEL_OK")
</pallas_src>

<mosaic_0001>
module attributes {stable_mosaic.version = 11 : i64} {
  func.func @m3s_kernel(%arg0: i32, %arg1: memref<16x32xbf16, #tpu.memory_space<vmem>>, %arg2: memref<32x32xbf16, #tpu.memory_space<vmem>>, %arg3: memref<1x32xf32, #tpu.memory_space<vmem>>, %arg4: memref<32x128xbf16, #tpu.memory_space<vmem>>, %arg5: memref<1x128xf32, #tpu.memory_space<vmem>>, %arg6: memref<16x128xf32, #tpu.memory_space<vmem>>, %arg7: memref<16x128xf32, #tpu.memory_space<vmem>>) attributes {dimension_semantics = [#tpu.dimension_semantics<parallel>], iteration_bounds = array<i64: 1>, scalar_prefetch = 0 : i64, scratch_operands = 0 : i64, tpu.core_type = #tpu.core_type<tc>, window_params = [{transform_indices = @transform_0, window_bounds = array<i64: 16, 32>}, {pipeline_mode = #tpu.pipeline_mode<synchronous>, transform_indices = @transform_1, window_bounds = array<i64: 32, 32>}, {pipeline_mode = #tpu.pipeline_mode<synchronous>, transform_indices = @transform_2, window_bounds = array<i64: 1, 32>}, {pipeline_mode = #tpu.pipeline_mode<synchronous>, transform_indices = @transform_3, window_bounds = array<i64: 32, 128>}, {pipeline_mode = #tpu.pipeline_mode<synchronous>, transform_indices = @transform_4, window_bounds = array<i64: 1, 128>}, {transform_indices = @transform_5, window_bounds = array<i64: 16, 128>}, {transform_indices = @transform_6, window_bounds = array<i64: 16, 128>}]} {
    %c0 = arith.constant 0 : index
    %c0_0 = arith.constant 0 : index
    %0 = vector.load %arg1[%c0, %c0_0] : memref<16x32xbf16, #tpu.memory_space<vmem>>, vector<16x32xbf16>
    %c0_1 = arith.constant 0 : index
    %c0_2 = arith.constant 0 : index
    %1 = vector.load %arg2[%c0_1, %c0_2] : memref<32x32xbf16, #tpu.memory_space<vmem>>, vector<32x32xbf16>
    %cst = arith.constant dense<0.000000e+00> : vector<16x32xf32>
    %2 = tpu.matmul %0, %1, %cst {dimension_numbers = #tpu.dot_dimension_numbers<[1], [0], [0], [1], [0, 0, 1, 1], [], []>} : vector<16x32xbf16>, vector<32x32xbf16>, vector<16x32xf32> -> vector<16x32xf32>
    %c0_3 = arith.constant 0 : index
    %c0_4 = arith.constant 0 : index
    %3 = vector.load %arg3[%c0_3, %c0_4] : memref<1x32xf32, #tpu.memory_space<vmem>>, vector<1x32xf32>
    %4 = vector.broadcast %3 : vector<1x32xf32> to vector<16x32xf32>
    %5 = arith.addf %2, %4 : vector<16x32xf32>
    %cst_5 = arith.constant 0.000000e+00 : f32
    %6 = vector.broadcast %cst_5 : f32 to vector<16x32xf32>
    %7 = arith.maximumf %5, %6 : vector<16x32xf32>
    %8 = arith.truncf %7 : vector<16x32xf32> to vector<16x32xbf16>
    %c0_6 = arith.constant 0 : index
    %c0_7 = arith.constant 0 : index
    %9 = vector.load %arg4[%c0_6, %c0_7] : memref<32x128xbf16, #tpu.memory_space<vmem>>, vector<32x128xbf16>
    %cst_8 = arith.constant dense<0.000000e+00> : vector<16x128xf32>
    %10 = tpu.matmul %8, %9, %cst_8 {dimension_numbers = #tpu.dot_dimension_numbers<[1], [0], [0], [1], [0, 0, 1, 1], [], []>} : vector<16x32xbf16>, vector<32x128xbf16>, vector<16x128xf32> -> vector<16x128xf32>
    %c0_9 = arith.constant 0 : index
    %c0_10 = arith.constant 0 : index
    %11 = vector.load %arg5[%c0_9, %c0_10] : memref<1x128xf32, #tpu.memory_space<vmem>>, vector<1x128xf32>
    %12 = vector.broadcast %11 : vector<1x128xf32> to vector<16x128xf32>
    %13 = arith.addf %10, %12 : vector<16x128xf32>
    %c0_11 = arith.constant 0 : index
    %c0_12 = arith.constant 0 : index
    %14 = vector.load %arg6[%c0_11, %c0_12] : memref<16x128xf32, #tpu.memory_space<vmem>>, vector<16x128xf32>
    tpu.vector_store %arg6[%c0_11, %c0_12], %13 {strides = array<i32>} : memref<16x128xf32, #tpu.memory_space<vmem>>, vector<16x128xf32>,
    %cst_13 = arith.constant dense<0xFF800000> : vector<16xf32>
    %15 = vector.multi_reduction <maximumf>, %13, %cst_13 [1] : vector<16x128xf32> to vector<16xf32>
    %16 = vector.shape_cast %15 : vector<16xf32> to vector<16x1xf32>
    %17 = vector.broadcast %16 : vector<16x1xf32> to vector<16x128xf32>
    %18 = arith.subf %13, %17 : vector<16x128xf32>
    %19 = math.exp %18 : vector<16x128xf32>
    %cst_14 = arith.constant dense<0.000000e+00> : vector<16xf32>
    %20 = vector.multi_reduction <add>, %19, %cst_14 [1] : vector<16x128xf32> to vector<16xf32>
    %21 = vector.shape_cast %20 : vector<16xf32> to vector<16x1xf32>
    %22 = tpu.reciprocal %21 {approx = true} : vector<16x1xf32> -> vector<16x1xf32>
    %23 = vector.broadcast %22 : vector<16x1xf32> to vector<16x128xf32>
    %24 = arith.mulf %19, %23 : vector<16x128xf32>
    %c0_15 = arith.constant 0 : index
    %c0_16 = arith.constant 0 : index
    %25 = vector.load %arg7[%c0_15, %c0_16] : memref<16x128xf32, #tpu.memory_space<vmem>>, vector<16x128xf32>
    tpu.vector_store %arg7[%c0_15, %c0_16], %24 {strides = array<i32>} : memref<16x128xf32, #tpu.memory_space<vmem>>, vector<16x128xf32>,
    return
  }
  func.func @transform_0(%arg0: i32) -> (i32, i32) {
    %c0_i32 = arith.constant 0 : i32
    %c0_i32_0 = arith.constant 0 : i32
    return %arg0, %c0_i32 : i32, i32
  }
  func.func @transform_1(%arg0: i32) -> (i32, i32) {
    %c0_i32 = arith.constant 0 : i32
    %c0_i32_0 = arith.constant 0 : i32
    %c0_i32_1 = arith.constant 0 : i32
    return %c0_i32, %c0_i32_0 : i32, i32
  }
  func.func @transform_2(%arg0: i32) -> (i32, i32) {
    %c0_i32 = arith.constant 0 : i32
    %c0_i32_0 = arith.constant 0 : i32
    %c0_i32_1 = arith.constant 0 : i32
    return %c0_i32, %c0_i32_0 : i32, i32
  }
  func.func @transform_3(%arg0: i32) -> (i32, i32) {
    %c0_i32 = arith.constant 0 : i32
    %c0_i32_0 = arith.constant 0 : i32
    %c0_i32_1 = arith.constant 0 : i32
    return %c0_i32, %c0_i32_0 : i32, i32
  }
  func.func @transform_4(%arg0: i32) -> (i32, i32) {
    %c0_i32 = arith.constant 0 : i32
    %c0_i32_0 = arith.constant 0 : i32
    %c0_i32_1 = arith.constant 0 : i32
    return %c0_i32, %c0_i32_0 : i32, i32
  }
  func.func @transform_5(%arg0: i32) -> (i32, i32) {
    %c0_i32 = arith.constant 0 : i32
    %c0_i32_0 = arith.constant 0 : i32
    return %arg0, %c0_i32 : i32, i32
  }
  func.func @transform_6(%arg0: i32) -> (i32, i32) {
    %c0_i32 = arith.constant 0 : i32
    %c0_i32_0 = arith.constant 0 : i32
    return %arg0, %c0_i32 : i32, i32
  }
}

</mosaic_0001>

<llo_original>
// kernel: tpu_custom_call.1
$region0: #{tpu_custom_call.1}
  #allocation0 [shape = 'u32[]', space=smem, size = 0x4, offset = 0x4, fixed_abs, tag = 'smem constant byte address 0x4 - core index']
  #allocation1 [shape = 'u32[72,128]{1,0:T(1,128)}', space=vmem, size = 0x9000, scoped, tag = 'internal scratch']
  %s0 = inlined_call_operand.hbm [shape: bf16[16,32], index: 0, kind: input, shape index: {}]
  %s1 = inlined_call_operand.hbm [shape: bf16[32,32], index: 1, kind: input, shape index: {}]
  %s2 = inlined_call_operand.vmem [shape: f32[1,32], index: 2, kind: input, shape index: {}]
  %s3 = inlined_call_operand.hbm [shape: bf16[32,128], index: 3, kind: input, shape index: {}]
  %s4 = inlined_call_operand.vmem [shape: f32[1,128], index: 4, kind: input, shape index: {}]
  %s5 = inlined_call_operand.hbm [shape: f32[16,128], index: 5, kind: output, shape index: {0}]
  %s6 = inlined_call_operand.hbm [shape: f32[16,128], index: 6, kind: output, shape index: {1}]
  %7 = xla_tuple %s5, %s6
  %s8 = sld [smem:[#allocation0]]
  $region50: #{tpu_custom_call.1} parent=0
    _
  %s10 = ssub.s32 1, %s8
  %s11 = scalar_select 0, %s10, %s8
  $region1: #{tpu_custom_call.1} parent=0
    #allocation2 [shape = 'u8[4096]{0}', space=vmem, size = 0x1000, scoped, tag = 'input window, operand 0, single buffered']
    #allocation3 [shape = 's32[1]{0}', space=sflag, size = 0x4, scoped, tag = 'scoped memory for tpu_custom_call.1']
    #allocation4 [shape = 's32[1]{0}', space=sflag, size = 0x4, scoped, tag = 'scoped memory for tpu_custom_call.1']
    #allocation5 [shape = 'u8[8192]{0}', space=vmem, size = 0x2000, scoped, tag = 'input window, operand 1, single buffered']
    #allocation6 [shape = 's32[1]{0}', space=sflag, size = 0x4, scoped, tag = 'scoped memory for tpu_custom_call.1']
    #allocation7 [shape = 'u8[8192]{0}', space=vmem, size = 0x2000, scoped, tag = 'input window, operand 3, single buffered']
    #allocation8 [shape = 'u8[8192]{0}', space=vmem, size = 0x2000, scoped, tag = 'output window, operand 0, single buffered']
    #allocation9 [shape = 'u8[8192]{0}', space=vmem, size = 0x2000, scoped, tag = 'output window, operand 1, single buffered']
    #allocation10 [shape = 's32[1]{0}', space=sflag, size = 0x4, scoped, tag = 'scoped memory for tpu_custom_call.1']
    %12 = vsyncpa [#allocation3], 0
    %13 = vsyncpa [#allocation6], 0
    %14 = vsyncpa [#allocation4], 0
    %15 = vsyncpa [#allocation10], 0
    // Predicated region
    $region2: #{tpu_custom_call.1} parent=1 // pred_check
      _
    $region3: #{tpu_custom_call.1} parent=1 // pred_check_branch
      %17 = sbr.rel (0) target = $region5
    $region4: #{tpu_custom_call.1} parent=1 // pred_region
      %19 = vsyncadd [#allocation3], 0
      %s20 = sshll.u32 %s0, 4
      %s21 = int_to_ptr.hbm [resolvable:$true] %s20
      %s22 = sshll.u32 [#allocation2], 4
      %s23 = int_to_ptr.vmem [resolvable:$true] %s22
      %28 = dma.hbm_to_vmem [thread:$0]  %s21, 128, %s23, [#allocation3], 64, 64, 4
    $region5: #{tpu_custom_call.1} parent=1 // pred_fallthru
      _
    // Predicated region
    $region6: #{tpu_custom_call.1} parent=1 // pred_check
      _
    $region7: #{tpu_custom_call.1} parent=1 // pred_check_branch
      %30 = sbr.rel (0) target = $region9
    $region8: #{tpu_custom_call.1} parent=1 // pred_region
      %32 = vsyncadd [#allocation6], 0
      %s33 = sshll.u32 %s1, 4
      %s34 = int_to_ptr.hbm [resolvable:$true] %s33
      %s35 = sshll.u32 [#allocation5], 4
      %s36 = int_to_ptr.vmem [resolvable:$true] %s35
      %41 = dma.hbm_to_vmem [thread:$0]  %s34, 256, %s36, [#allocation6], 64, 64, 4
    $region9: #{tpu_custom_call.1} parent=1 // pred_fallthru
      _
    // Predicated region
    $region10: #{tpu_custom_call.1} parent=1 // pred_check
      _
    $region11: #{tpu_custom_call.1} parent=1 // pred_check_branch
      %43 = sbr.rel (0) target = $region13
    $region12: #{tpu_custom_call.1} parent=1 // pred_region
      _
    $region13: #{tpu_custom_call.1} parent=1 // pred_fallthru
      _
    // Predicated region
    $region14: #{tpu_custom_call.1} parent=1 // pred_check
      _
    $region15: #{tpu_custom_call.1} parent=1 // pred_check_branch
      %45 = sbr.rel (0) target = $region17
    $region16: #{tpu_custom_call.1} parent=1 // pred_region
      %47 = vsyncadd [#allocation6], 0
      %s48 = sshll.u32 %s3, 4
      %s49 = int_to_ptr.hbm [resolvable:$true] %s48
      %s50 = sshll.u32 [#allocation7], 4
      %s51 = int_to_ptr.vmem [resolvable:$true] %s50
      %56 = dma.hbm_to_vmem [thread:$0]  %s49, 256, %s51, [#allocation6], 64, 64, 4
    $region17: #{tpu_custom_call.1} parent=1 // pred_fallthru
      _
    // Predicated region
    $region18: #{tpu_custom_call.1} parent=1 // pred_check
      _
    $region19: #{tpu_custom_call.1} parent=1 // pred_check_branch
      %58 = sbr.rel (0) target = $region21
    $region20: #{tpu_custom_call.1} parent=1 // pred_region
      _
    $region21: #{tpu_custom_call.1} parent=1 // pred_fallthru
      _
    // Predicated region
    $region22: #{tpu_custom_call.1} parent=1 // pred_check
      _
    $region23: #{tpu_custom_call.1} parent=1 // pred_check_branch
      %60 = sbr.rel (0) target = $region25
    $region24: #{tpu_custom_call.1} parent=1 // pred_region
      %62 = dma.done [#allocation3], 128
    $region25: #{tpu_custom_call.1} parent=1 // pred_fallthru
      _
    // Predicated region
    $region26: #{tpu_custom_call.1} parent=1 // pred_check
      _
    $region27: #{tpu_custom_call.1} parent=1 // pred_check_branch
      %64 = sbr.rel (0) target = $region29
    $region28: #{tpu_custom_call.1} parent=1 // pred_region
      %66 = dma.done [#allocation6], 256
    $region29: #{tpu_custom_call.1} parent=1 // pred_fallthru
      _
    // Predicated region
    $region30: #{tpu_custom_call.1} parent=1 // pred_check
      _
    $region31: #{tpu_custom_call.1} parent=1 // pred_check_branch
      %68 = sbr.rel (0) target = $region33
    $region32: #{tpu_custom_call.1} parent=1 // pred_region
      %70 = dma.done [#allocation6], 256
    $region33: #{tpu_custom_call.1} parent=1 // pred_fallthru
      _
    %v72 = vld [vmem:[#allocation2] sm:$0xf]
    %v73 = vld [vmem:[#allocation2 + $0x4] sm:$0xf]
    %v74 = vld [vmem:[#allocation5] sm:$0xf]
    %v75 = vld [vmem:[#allocation5 + $0x4] sm:$0xf]
    %v76 = vld [vmem:[#allocation5 + $0x8] sm:$0xf]
    %v77 = vld [vmem:[#allocation5 + $0xc] sm:$0xf]
    %v78 = vld [vmem:[%s2] sm:$0x1]
    %v80 = vperm.slane %v78, 0
    %v84 = vunpack.c.l.b16 %v72
    %v85 = vunpack.c.l.b16 %v73
    %v86 = vpack.c.b16 %v85, %v84
    %v91 = vunpack.c.l.b16 %v74
    %v92 = vunpack.c.l.b16 %v75
    %v93 = vunpack.c.l.b16 %v76
    %v94 = vunpack.c.l.b16 %v77
    %v95 = vpack.c.b16 %v92, %v91
    %v96 = vpack.c.b16 %v94, %v93
    %vm99 = vcmask 261120
    %v101 = vsel %vm99, %v86, 0
    %103 = vmatpush.bf16.msra.mxu0 0
    %104 = vmatpush.bf16.msra.mxu0 0
    %105 = vmatpush.bf16.msra.mxu0 0
    %106 = vmatpush.bf16.msra.mxu0 0
    %107 = vmatpush.bf16.msra.mxu0 0
    %108 = vmatpush.bf16.msra.mxu0 0
    %109 = vmatpush.bf16.msra.mxu0 %v96
    %110 = vmatpush.bf16.msra.mxu0 %v95
    %111 = vmatmul.bf16.gmra.mxu0 %v101
    %v112 = vpop.f32.mrf.mxu0
    %v113 = vadd.f32 %v80, %v112
    %v114 = vpop.f32.mrf.mxu0
    %v115 = vadd.f32 %v80, %v114
    %116 = vdwg.mxu0
    %v117 = vmax.f32 %v113, 0.0
    %v118 = vmax.f32 %v115, 0.0
    %v119 = vpack.c.bf16 %v118, %v117
    %v120 = vld [vmem:[#allocation7] sm:$0xf]
    %v121 = vld [vmem:[#allocation7 + $0x4] sm:$0xf]
    %v122 = vld [vmem:[#allocation7 + $0x8] sm:$0xf]
    %v123 = vld [vmem:[#allocation7 + $0xc] sm:$0xf]
    %v124 = vld [vmem:[%s4] sm:$0x1]
    %v126 = vperm.slane %v124, 0
    %v132 = vunpack.c.l.b16 %v120
    %v133 = vunpack.c.l.b16 %v121
    %v134 = vunpack.c.l.b16 %v122
    %v135 = vunpack.c.l.b16 %v123
    %v136 = vpack.c.b16 %v133, %v132
    %v137 = vpack.c.b16 %v135, %v134
    %v141 = vsel %vm99, %v119, 0
    %143 = vmatpush.bf16.msra.mxu0 0
    %144 = vmatpush.bf16.msra.mxu0 0
    %145 = vmatpush.bf16.msra.mxu0 0
    %146 = vmatpush.bf16.msra.mxu0 0
    %147 = vmatpush.bf16.msra.mxu0 0
    %148 = vmatpush.bf16.msra.mxu0 0
    %149 = vmatpush.bf16.msra.mxu0 %v137
    %150 = vmatpush.bf16.msra.mxu0 %v136
    %151 = vmatmul.bf16.gmra.mxu0 %v141
    %v152 = vpop.f32.mrf.mxu0
    %v153 = vadd.f32 %v126, %v152
    %v154 = vpop.f32.mrf.mxu0
    %v155 = vadd.f32 %v126, %v154
    %156 = vdwg.mxu0
    %157 = vst [vmem:[#allocation8] sm:$0xff] %v153
    %158 = vst [vmem:[#allocation8 + $0x8] sm:$0xff] %v155
    %159 = vmax.xlane.f32.xlu0 %v153
    %v160 = vpop.xlane.xlu0 %159
    %161 = vmax.xlane.f32.xlu0 %v155
    %v162 = vpop.xlane.xlu0 %161
    %v163 = vsub.f32 %v153, %v160
    %v164 = vsub.f32 %v155, %v162
    %v165 = vmul.f32 %v163, 1.442695
    %v166 = vpow.pop %v165
    %v167 = vmul.f32 %v164, 1.442695
    %v168 = vpow.pop %v167
    %169 = vadd.xlane.f32.xlu0 %v166
    %v170 = vpop.xlane.xlu0 %169
    %171 = vadd.xlane.f32.xlu0 %v168
    %v172 = vpop.xlane.xlu0 %171
    %v173 = vrcp.pop %v170
    %v174 = vrcp.pop %v172
    %v175 = vmul.f32 %v166, %v173
    %v176 = vmul.f32 %v168, %v174
    %177 = vst [vmem:[#allocation9] sm:$0xff] %v175
    %178 = vst [vmem:[#allocation9 + $0x8] sm:$0xff] %v176
    // Predicated region
    $region34: #{tpu_custom_call.1} parent=1 // pred_check
      _
    $region35: #{tpu_custom_call.1} parent=1 // pred_check_branch
      %180 = sbr.rel (0) target = $region37
    $region36: #{tpu_custom_call.1} parent=1 // pred_region
      %182 = vsyncadd [#allocation4], 0
      %s183 = sshll.u32 [#allocation8], 4
      %s184 = int_to_ptr.vmem [resolvable:$true] %s183
      %s185 = sshll.u32 %s5, 4
      %s186 = int_to_ptr.hbm [resolvable:$true] %s185
      %191 = dma.vmem_to_hbm [thread:$0]  %s184, 256, %s186, [#allocation4], 128, 128, 8
    $region37: #{tpu_custom_call.1} parent=1 // pred_fallthru
      _
    // Predicated region
    $region38: #{tpu_custom_call.1} parent=1 // pred_check
      _
    $region39: #{tpu_custom_call.1} parent=1 // pred_check_branch
      %193 = sbr.rel (0) target = $region41
    $region40: #{tpu_custom_call.1} parent=1 // pred_region
      %195 = vsyncadd [#allocation10], 0
      %s196 = sshll.u32 [#allocation9], 4
      %s197 = int_to_ptr.vmem [resolvable:$true] %s196
      %s198 = sshll.u32 %s6, 4
      %s199 = int_to_ptr.hbm [resolvable:$true] %s198
      %204 = dma.vmem_to_hbm [thread:$0]  %s197, 256, %s199, [#allocation10], 128, 128, 8
    $region41: #{tpu_custom_call.1} parent=1 // pred_fallthru
      _
    // Predicated region
    $region42: #{tpu_custom_call.1} parent=1 // pred_check
      _
    $region43: #{tpu_custom_call.1} parent=1 // pred_check_branch
      %206 = sbr.rel (0) target = $region45
    $region44: #{tpu_custom_call.1} parent=1 // pred_region
      %208 = dma.done [#allocation4], 256
    $region45: #{tpu_custom_call.1} parent=1 // pred_fallthru
      _
    // Predicated region
    $region46: #{tpu_custom_call.1} parent=1 // pred_check
      _
    $region47: #{tpu_custom_call.1} parent=1 // pred_check_branch
      %210 = sbr.rel (0) target = $region49
    $region48: #{tpu_custom_call.1} parent=1 // pred_region
      %212 = dma.done [#allocation10], 256
    $region49: #{tpu_custom_call.1} parent=1 // pred_fallthru
      _
    %213 = vsyncpa [#allocation3], 1
    %214 = vsyncpa [#allocation6], 1
    %215 = vsyncpa [#allocation4], 1
    %216 = vsyncpa [#allocation10], 1

</llo_original>
